<compile_context>
chip_gen: v6e
topology: v6e:2x2x1
jax: 0.10.0
libtpu: 0.0.40
codegen_flags: <defaults>
</compile_context>

<pallas_src>
import jax
import jax.numpy as jnp
from jax.experimental import pallas as pl
from jax.experimental.pallas import tpu as pltpu


def _shape_check(x):
    # Mirrors Diff._shape_check: always True in the reference.
    return True


def _copy_kernel(x_ref, o_ref):
    # TODO(synk): reference forward body is `pass` (returns None) — no finite
    #             difference / momentum-constraint math is defined to port.
    o_ref[...] = x_ref[...]


_LANE = 512            # lane-dense last dim (multiple of 128 -> unmasked vst)
_MAX_BLOCK_ROWS = 1024  # 1024x512 f32 = 2 MiB/tile -> <=8 MiB double-buffered


def _round_up(a, b):
    return (a + b - 1) // b * b


def diff_forward(x, momentum_constraint=None):
    """Pallas equivalent of Diff(momentum_constraint).forward(x)."""
    assert _shape_check(x)
    orig_shape = x.shape
    dtype = x.dtype
    total = x.size
    itemsize = jnp.dtype(dtype).itemsize

    # Flatten to a single lane-dense slab (rows, 512); pad rows so the row
    # block divides evenly.  Row block is kept a multiple of 32 so the layout
    # stays legal if the field is ever stored as bf16/int8 (sublane packing).
    cols = _LANE
    rows = pl.cdiv(total, cols)
    block_rows = min(_MAX_BLOCK_ROWS, _round_up(rows, 32))
    padded_rows = _round_up(rows, block_rows)
    # Prefer >=2 grid steps so v7x can split the copy across its 2 TensorCores.
    if padded_rows // block_rows < 2 and block_rows > 32:
        block_rows = max(32, _round_up(block_rows // 2, 32))
        padded_rows = _round_up(rows, block_rows)

    flat = jnp.ravel(x)
    pad = padded_rows * cols - total
    if pad:
        flat = jnp.pad(flat, (0, pad))
    x2d = flat.reshape(padded_rows, cols)

    grid = (padded_rows // block_rows,)
    block = (block_rows, cols)

    out2d = pl.pallas_call(
        _copy_kernel,
        out_shape=jax.ShapeDtypeStruct((padded_rows, cols), dtype),
        grid_spec=pltpu.PrefetchScalarGridSpec(
            num_scalar_prefetch=0,
            grid=grid,
            in_specs=[pl.BlockSpec(block, lambda i: (i, 0))],
            out_specs=pl.BlockSpec(block, lambda i: (i, 0)),
        ),
        # Identity op: donate the padded input buffer as the output so no
        # second HBM buffer is allocated.
        input_output_aliases={0: 0},
        compiler_params=pltpu.CompilerParams(
            dimension_semantics=("parallel",),
            # Raise v5e's 16 MiB default; still within v6e/v7x defaults.
            vmem_limit_bytes=32 * 1024 * 1024,
        ),
        cost_estimate=pl.CostEstimate(
            flops=0,
            transcendentals=0,
            bytes_accessed=2 * padded_rows * cols * itemsize,
        ),
    )(x2d)

    return out2d.reshape(-1)[:total].reshape(orig_shape)


if __name__ == "__main__":
    key = jax.random.PRNGKey(0)
    # Small NCHW input consistent with a PDE field: batch=2, channels=4, 16x16.
    x = jax.random.normal(key, (2, 4, 16, 16), dtype=jnp.float32)

    y = diff_forward(x, momentum_constraint=None)
    jax.block_until_ready(y)

    # Sanity: identity pass-through must match input exactly.
    assert y.shape == x.shape
    assert bool(jnp.all(y == x))

    print("KERNEL_OK")
</pallas_src>

<mosaic_0001>
module attributes {stable_mosaic.version = 11 : i64} {
  func.func @_copy_kernel(%arg0: i32, %arg1: memref<32x512xf32, #tpu.memory_space<vmem>>, %arg2: memref<32x512xf32, #tpu.memory_space<vmem>>) attributes {dimension_semantics = [#tpu.dimension_semantics<parallel>], iteration_bounds = array<i64: 1>, scalar_prefetch = 0 : i64, scratch_operands = 0 : i64, tpu.core_type = #tpu.core_type<tc>, window_params = [{transform_indices = @transform_0, window_bounds = array<i64: 32, 512>}, {transform_indices = @transform_1, window_bounds = array<i64: 32, 512>}]} {
    %c0 = arith.constant 0 : index
    %c0_0 = arith.constant 0 : index
    %0 = vector.load %arg1[%c0, %c0_0] : memref<32x512xf32, #tpu.memory_space<vmem>>, vector<32x512xf32>
    %c0_1 = arith.constant 0 : index
    %c0_2 = arith.constant 0 : index
    %1 = vector.load %arg2[%c0_1, %c0_2] : memref<32x512xf32, #tpu.memory_space<vmem>>, vector<32x512xf32>
    tpu.vector_store %arg2[%c0_1, %c0_2], %0 {strides = array<i32>} : memref<32x512xf32, #tpu.memory_space<vmem>>, vector<32x512xf32>,
    return
  }
  func.func @transform_0(%arg0: i32) -> (i32, i32) {
    %c0_i32 = arith.constant 0 : i32
    %c0_i32_0 = arith.constant 0 : i32
    return %arg0, %c0_i32 : i32, i32
  }
  func.func @transform_1(%arg0: i32) -> (i32, i32) {
    %c0_i32 = arith.constant 0 : i32
    %c0_i32_0 = arith.constant 0 : i32
    return %arg0, %c0_i32 : i32, i32
  }
}

</mosaic_0001>

<llo_original>
// kernel: tpu_custom_call.1
$region0: #{tpu_custom_call.1}
  #allocation0 [shape = 'u32[]', space=smem, size = 0x4, offset = 0x4, fixed_abs, tag = 'smem constant byte address 0x4 - core index']
  #allocation1 [shape = 'u32[144,128]{1,0:T(1,128)}', space=vmem, size = 0x12000, scoped, tag = 'internal scratch']
  %s0 = inlined_call_operand.hbm [shape: f32[32,512], index: 0, kind: input, shape index: {}, may-alias: {0,1}]
  %s1 = inlined_call_operand.hbm [shape: f32[32,512], index: 1, kind: output, shape index: {}, may-alias: {0,1}]
  %s2 = sld [smem:[#allocation0]]
  $region18: #{tpu_custom_call.1} parent=0
    _
  %s4 = ssub.s32 1, %s2
  %s5 = scalar_select 0, %s4, %s2
  $region1: #{tpu_custom_call.1} parent=0
    #allocation2 [shape = 'u8[65536]{0}', space=vmem, size = 0x10000, scoped, tag = 'input window, operand 0, single buffered']
    #allocation3 [shape = 's32[1]{0}', space=sflag, size = 0x4, scoped, tag = 'scoped memory for tpu_custom_call.1']
    #allocation4 [shape = 's32[1]{0}', space=sflag, size = 0x4, scoped, tag = 'scoped memory for tpu_custom_call.1']
    #allocation5 [shape = 'u8[65536]{0}', space=vmem, size = 0x10000, scoped, tag = 'output window, operand 0, single buffered']
    %6 = vsyncpa [#allocation3], 0
    %7 = vsyncpa [#allocation4], 0
    // Predicated region
    $region2: #{tpu_custom_call.1} parent=1 // pred_check
      _
    $region3: #{tpu_custom_call.1} parent=1 // pred_check_branch
      %9 = sbr.rel (0) target = $region5
    $region4: #{tpu_custom_call.1} parent=1 // pred_region
      %s11 = ssub.s32 2048, 2048
      %12 = vsyncadd [#allocation3], %s11
      %s13 = sshll.u32 [#allocation2], 4
      %s14 = int_to_ptr.vmem [resolvable:$true] %s13
      %19 = dma.hbm_to_vmem [thread:$0]  %s0, 2048, %s14, [#allocation3], 512, 512, 32
    $region5: #{tpu_custom_call.1} parent=1 // pred_fallthru
      _
    // Predicated region
    $region6: #{tpu_custom_call.1} parent=1 // pred_check
      _
    $region7: #{tpu_custom_call.1} parent=1 // pred_check_branch
      %21 = sbr.rel (0) target = $region9
    $region8: #{tpu_custom_call.1} parent=1 // pred_region
      %22 = dma.done [#allocation3], 2048
    $region9: #{tpu_custom_call.1} parent=1 // pred_fallthru
      _
    %v23 = vld [vmem:[#allocation2] sm:$0xff]
    %v24 = vld [vmem:[#allocation2 + $0x8] sm:$0xff]
    %v25 = vld [vmem:[#allocation2 + $0x10] sm:$0xff]
    %v26 = vld [vmem:[#allocation2 + $0x18] sm:$0xff]
    %v27 = vld [vmem:[#allocation2 + $0x20] sm:$0xff]
    %v28 = vld [vmem:[#allocation2 + $0x28] sm:$0xff]
    %v29 = vld [vmem:[#allocation2 + $0x30] sm:$0xff]
    %v30 = vld [vmem:[#allocation2 + $0x38] sm:$0xff]
    %v31 = vld [vmem:[#allocation2 + $0x40] sm:$0xff]
    %v32 = vld [vmem:[#allocation2 + $0x48] sm:$0xff]
    %v33 = vld [vmem:[#allocation2 + $0x50] sm:$0xff]
    %v34 = vld [vmem:[#allocation2 + $0x58] sm:$0xff]
    %v35 = vld [vmem:[#allocation2 + $0x60] sm:$0xff]
    %v36 = vld [vmem:[#allocation2 + $0x68] sm:$0xff]
    %v37 = vld [vmem:[#allocation2 + $0x70] sm:$0xff]
    %v38 = vld [vmem:[#allocation2 + $0x78] sm:$0xff]
    %39 = vst [vmem:[#allocation5] sm:$0xff] %v23
    %40 = vst [vmem:[#allocation5 + $0x8] sm:$0xff] %v24
    %41 = vst [vmem:[#allocation5 + $0x10] sm:$0xff] %v25
    %42 = vst [vmem:[#allocation5 + $0x18] sm:$0xff] %v26
    %43 = vst [vmem:[#allocation5 + $0x20] sm:$0xff] %v27
    %44 = vst [vmem:[#allocation5 + $0x28] sm:$0xff] %v28
    %45 = vst [vmem:[#allocation5 + $0x30] sm:$0xff] %v29
    %46 = vst [vmem:[#allocation5 + $0x38] sm:$0xff] %v30
    %47 = vst [vmem:[#allocation5 + $0x40] sm:$0xff] %v31
    %48 = vst [vmem:[#allocation5 + $0x48] sm:$0xff] %v32
    %49 = vst [vmem:[#allocation5 + $0x50] sm:$0xff] %v33
    %50 = vst [vmem:[#allocation5 + $0x58] sm:$0xff] %v34
    %51 = vst [vmem:[#allocation5 + $0x60] sm:$0xff] %v35
    %52 = vst [vmem:[#allocation5 + $0x68] sm:$0xff] %v36
    %53 = vst [vmem:[#allocation5 + $0x70] sm:$0xff] %v37
    %54 = vst [vmem:[#allocation5 + $0x78] sm:$0xff] %v38
    // Predicated region
    $region10: #{tpu_custom_call.1} parent=1 // pred_check
      _
    $region11: #{tpu_custom_call.1} parent=1 // pred_check_branch
      %56 = sbr.rel (0) target = $region13
    $region12: #{tpu_custom_call.1} parent=1 // pred_region
      %s58 = ssub.s32 2048, 2048
      %59 = vsyncadd [#allocation4], %s58
      %s60 = sshll.u32 [#allocation5], 4
      %s61 = int_to_ptr.vmem [resolvable:$true] %s60
      %66 = dma.vmem_to_hbm [thread:$0]  %s61, 2048, %s1, [#allocation4], 512, 512, 32
    $region13: #{tpu_custom_call.1} parent=1 // pred_fallthru
      _
    // Predicated region
    $region14: #{tpu_custom_call.1} parent=1 // pred_check
      _
    $region15: #{tpu_custom_call.1} parent=1 // pred_check_branch
      %68 = sbr.rel (0) target = $region17
    $region16: #{tpu_custom_call.1} parent=1 // pred_region
      %69 = dma.done [#allocation4], 2048
    $region17: #{tpu_custom_call.1} parent=1 // pred_fallthru
      _
    %70 = vsyncpa [#allocation3], 1
    %71 = vsyncpa [#allocation4], 1

</llo_original>
